<compile_context>
chip_gen: v6e
topology: v6e:2x2x1
jax: 0.10.0
libtpu: 0.0.40
codegen_flags: <defaults>
</compile_context>

<pallas_src>
import math
import functools

import jax
import jax.numpy as jnp
import numpy as np
from jax.experimental import pallas as pl
from jax.experimental.pallas import tpu as pltpu


def _round_up(x, m):
    return (x + m - 1) // m * m


def _recip(x):
    """EUP approximate reciprocal + one Newton step (~f32 accurate, off the VALU path)."""
    y = pl.reciprocal(x, approx=True)
    return y * (2.0 - x * y)


def _tpu_vmem_capacity_bytes():
    try:
        return int(pltpu.get_tpu_info().vmem_capacity_bytes)
    except Exception:
        return 64 * 1024 * 1024          # conservative fallback (v7x-sized)


# ----------------------------------------------------------------------------
# Kernel 1: memory attention on flattened (B*S) rows.
#   q = x @ (Wq/sqrt(H)); s = q @ kT; softmax; (attn @ v) @ Wo
#   kT / v are precomputed (batch-invariant) and single-buffered.
# ----------------------------------------------------------------------------
def _attn_rows_kernel(x_ref, kT_ref, v_ref, wq_ref, wo_ref, out_ref, *, m_true):
    x = x_ref[...]                                    # (rows, H), compute dtype
    cdt = x.dtype

    q = jnp.dot(x, wq_ref[...], preferred_element_type=jnp.float32).astype(cdt)
    s = jnp.dot(q, kT_ref[...], preferred_element_type=jnp.float32)   # (rows, Mp)
    if m_true != s.shape[-1]:
        # memory bank was lane-padded to a multiple of 128: mask padded columns
        col = jax.lax.broadcasted_iota(jnp.int32, s.shape, 1)
        s = jnp.where(col < m_true, s, -1e30)

    m = jnp.max(s, axis=-1, keepdims=True)
    p = jnp.exp(s - m)
    attn = p * _recip(jnp.sum(p, axis=-1, keepdims=True))

    mo = jnp.dot(attn.astype(cdt), v_ref[...], preferred_element_type=jnp.float32)
    out = jnp.dot(mo.astype(cdt), wo_ref[...], preferred_element_type=jnp.float32)
    out_ref[...] = out.astype(out_ref.dtype)          # lane-dense (rows, H) store


# ----------------------------------------------------------------------------
# Kernel 2: GRU-style memory update.
#   grid = (M_tiles ["parallel"], B ["arbitrary" = batch-mean reduction]).
#   The mem-side gate matmul (and bias) is hoisted at b == 0 per memory-row
#   tile; the updated memory is accumulated in f32 and finalized (mean) at
#   b == B-1.  Correct under megacore because each core owns whole m-tiles and
#   the b axis stays sequential.
# ----------------------------------------------------------------------------
def _gru_update_kernel(x_ref, mem_ref, wi_ref, wgm_ref, bgm_ref, wgc_ref,
                       bn_ref, wnm_ref, newmem_ref, gmem_scr, acc_scr,
                       *, inv_batch):
    b = pl.program_id(1)
    H = mem_ref.shape[1]
    cdt = wnm_ref.dtype
    memf = mem_ref[...]                               # (tm, H) f32

    @pl.when(b == 0)
    def _init():
        # batch-invariant: mem @ [Wu_m | Wr_m] + [bu | br], kept resident
        gmem_scr[...] = (jnp.dot(memf.astype(cdt), wgm_ref[...],
                                 preferred_element_type=jnp.float32) + bgm_ref[...])
        acc_scr[...] = jnp.zeros_like(acc_scr)

    # ---- importance softmax over the sequence -> context vector ----
    # VPU multiply + lane reduce (a (S,1) MXU matvec would waste 127/128 cols).
    # Scalar scorer bias dropped: softmax over the sequence axis is shift-invariant.
    xf = x_ref[0].astype(jnp.float32)                 # (S, H)
    imp = jnp.sum(xf * wi_ref[...], axis=-1, keepdims=True)          # (S, 1)
    ip = jnp.exp(imp - jnp.max(imp, axis=0, keepdims=True))
    iw = ip * _recip(jnp.sum(ip, axis=0, keepdims=True))
    ctx = jnp.sum(xf * iw, axis=0, keepdims=True)                     # (1, H) f32

    # ---- GRU gates ----
    gc = jnp.dot(ctx.astype(cdt), wgc_ref[...],
                 preferred_element_type=jnp.float32)                  # (1, 3H)
    gm = gmem_scr[...]                                                # (tm, 2H)
    u = jax.nn.sigmoid(gm[:, :H] + gc[:, :H])
    r = jax.nn.sigmoid(gm[:, H:] + gc[:, H:2 * H])
    n = jnp.tanh(jnp.dot((r * memf).astype(cdt), wnm_ref[...],
                         preferred_element_type=jnp.float32)
                 + gc[:, 2 * H:] + bn_ref[...])
    acc_scr[...] += (1.0 - u) * memf + u * n                          # f32 accumulate

    @pl.when(b == pl.num_programs(1) - 1)
    def _finalize():
        newmem_ref[...] = (acc_scr[...] * inv_batch).astype(newmem_ref.dtype)


# ----------------------------------------------------------------------------
# Wrappers
# ----------------------------------------------------------------------------
def _memory_attention(x, params, compute_dtype, vmem_limit, vmem_cap):
    B, S, H = x.shape
    mem = params["memory_bank"]
    M = mem.shape[0]
    scale = 1.0 / math.sqrt(H)
    hi = jax.lax.Precision.HIGHEST
    cast = lambda a: a.astype(compute_dtype)

    # Batch-invariant k/v: ONE plain XLA matmul each (not per grid step).
    kT = jnp.dot(mem, params["wk"], precision=hi).T          # (H, M) f32
    v = jnp.dot(mem, params["wv"], precision=hi)             # (M, H) f32
    Mp = max(_round_up(M, 128), 128)                         # lane-dense scores tile
    if Mp != M:
        kT = jnp.pad(kT, ((0, 0), (0, Mp - M)))
        v = jnp.pad(v, ((0, Mp - M), (0, 0)))
    wq_s = params["wq"] * scale                              # fold 1/sqrt(H) into Wq

    N = B * S
    tile_target = 1024 if vmem_cap >= (96 << 20) else 512    # 128-MiB parts vs v7x
    tile = min(tile_target, _round_up(N, 16))                # bf16 packs 16 sublanes
    Np = _round_up(N, tile)
    xr = x.reshape(N, H)
    if Np != N:
        xr = jnp.pad(xr, ((0, Np - N), (0, 0)))

    const = lambda i: (0, 0)
    sb = pl.Buffered(1)   # grid-invariant blocks: single buffer (halves weight VMEM)

    out = pl.pallas_call(
        functools.partial(_attn_rows_kernel, m_true=M),
        out_shape=jax.ShapeDtypeStruct((Np, H), x.dtype),
        grid_spec=pltpu.PrefetchScalarGridSpec(
            num_scalar_prefetch=0,
            grid=(Np // tile,),
            in_specs=[
                pl.BlockSpec((tile, H), lambda i: (i, 0)),                 # x rows
                pl.BlockSpec((H, Mp), const, pipeline_mode=sb),            # kT
                pl.BlockSpec((Mp, H), const, pipeline_mode=sb),            # v
                pl.BlockSpec((H, H), const, pipeline_mode=sb),             # Wq*scale
                pl.BlockSpec((H, H), const, pipeline_mode=sb),             # Wo
            ],
            out_specs=pl.BlockSpec((tile, H), lambda i: (i, 0)),
        ),
        compiler_params=pltpu.CompilerParams(
            dimension_semantics=("parallel",),
            vmem_limit_bytes=vmem_limit),
    )(cast(xr), cast(kT), cast(v), cast(wq_s), cast(params["wo"]))
    return out[:N].reshape(B, S, H)


def _gru_memory_update(x, params, compute_dtype, vmem_limit):
    B, S, H = x.shape
    mem = params["memory_bank"].astype(jnp.float32)
    M = mem.shape[0]
    cast = lambda a: a.astype(compute_dtype)

    # Concatenate gate weights: ctx side -> one (1,H)@(H,3H) matmul per step,
    # mem side -> one hoisted (tm,H)@(H,2H) matmul at b == 0.
    wg_mem = jnp.concatenate([params["wu_m"], params["wr_m"]], axis=1)   # (H, 2H)
    bg_mem = jnp.concatenate([params["bu"], params["br"]], axis=1)       # (1, 2H)
    wg_ctx = jnp.concatenate([params["wu_c"], params["wr_c"], params["wn_c"]],
                             axis=1)                                     # (H, 3H)

    tm = 256 if (M % 256 == 0) else M        # memory-row tile: fits v7x + TC parallel
    n_m = M // tm

    const = lambda m, b: (0, 0)
    sb = pl.Buffered(1)

    new_mem = pl.pallas_call(
        functools.partial(_gru_update_kernel, inv_batch=1.0 / B),
        out_shape=jax.ShapeDtypeStruct((M, H), params["memory_bank"].dtype),
        grid_spec=pltpu.PrefetchScalarGridSpec(
            num_scalar_prefetch=0,
            grid=(n_m, B),                               # batch-mean reduction last
            in_specs=[
                pl.BlockSpec((1, S, H), lambda m, b: (b, 0, 0)),           # x
                pl.BlockSpec((tm, H), lambda m, b: (m, 0)),                # memory rows (f32)
                pl.BlockSpec((1, H), const, pipeline_mode=sb),             # importance row
                pl.BlockSpec((H, 2 * H), const, pipeline_mode=sb),         # [Wu_m|Wr_m]
                pl.BlockSpec((1, 2 * H), const, pipeline_mode=sb),         # [bu|br]
                pl.BlockSpec((H, 3 * H), const, pipeline_mode=sb),         # [Wu_c|Wr_c|Wn_c]
                pl.BlockSpec((1, H), const, pipeline_mode=sb),             # bn
                pl.BlockSpec((H, H), const, pipeline_mode=sb),             # Wn_m
            ],
            out_specs=pl.BlockSpec((tm, H), lambda m, b: (m, 0)),
            scratch_shapes=[
                pltpu.VMEM((tm, 2 * H), jnp.float32),    # hoisted mem gate pre-acts
                pltpu.VMEM((tm, H), jnp.float32),        # f32 accumulator for mean
            ],
        ),
        compiler_params=pltpu.CompilerParams(
            dimension_semantics=("parallel", "arbitrary"),
            vmem_limit_bytes=vmem_limit),
    )(cast(x), mem, params["wi"].astype(jnp.float32),
      cast(wg_mem), bg_mem.astype(jnp.float32),
      cast(wg_ctx), params["bn"].astype(jnp.float32),
      cast(params["wn_m"]))
    return new_mem


def working_memory_forward(x, params, update_memory=False,
                           compute_dtype=jnp.bfloat16):
    """x: (B, S, H). Returns memory_enhanced (B, S, H); if update_memory, also
    returns the new memory bank (M, H) — functional replacement for the
    in-place torch `.data` assignment."""
    cap = _tpu_vmem_capacity_bytes()
    vmem_limit = int(cap * 7 // 8)           # explicit scoped-VMEM limit, < physical
    out = _memory_attention(x, params, compute_dtype, vmem_limit, cap)
    if not update_memory:
        return out
    new_mem = _gru_memory_update(x, params, compute_dtype, vmem_limit)
    return out, new_mem


# ----------------------------------------------------------------------------
# Deterministic parameter init (shapes mirror WorkingMemoryModule.__init__)
# ----------------------------------------------------------------------------
def init_params(key, hidden_size, memory_size):
    H, M = hidden_size, memory_size
    ks = jax.random.split(key, 12)
    w = lambda k, shp: jax.random.normal(k, shp, jnp.float32) * (H ** -0.5)

    # torch Linear(2H, H) weight is (H, 2H); stored transposed and split into
    # the memory half and the context half: (2H, H) -> (H, H) + (H, H).
    wu_t = w(ks[4], (2 * H, H))
    wr_t = w(ks[5], (2 * H, H))
    wn_t = w(ks[6], (2 * H, H))
    return {
        "memory_bank": jax.random.normal(ks[0], (M, H), jnp.float32),
        "wq": w(ks[1], (H, H)), "wk": w(ks[2], (H, H)),
        "wv": w(ks[3], (H, H)), "wo": w(ks[7], (H, H)),
        "wu_m": wu_t[:H], "wu_c": wu_t[H:],
        "bu": 0.1 * jax.random.normal(ks[8], (1, H), jnp.float32),
        "wr_m": wr_t[:H], "wr_c": wr_t[H:],
        "br": 0.1 * jax.random.normal(ks[9], (1, H), jnp.float32),
        "wn_m": wn_t[:H], "wn_c": wn_t[H:],
        "bn": 0.1 * jax.random.normal(ks[10], (1, H), jnp.float32),
        "wi": w(ks[11], (1, H)),       # importance_scorer weight row
        "bi": jnp.float32(0.37),       # scalar bias (softmax-invariant; kernel drops it)
    }


# ----------------------------------------------------------------------------
# Pure-JAX reference (mirrors the PyTorch forward) for correctness checking
# ----------------------------------------------------------------------------
def reference_forward(x, p, update_memory=False):
    B, S, H = x.shape
    memb = jnp.broadcast_to(p["memory_bank"][None], (B,) + p["memory_bank"].shape)
    q = x @ p["wq"]
    k = memb @ p["wk"]
    v = memb @ p["wv"]
    scores = (q @ jnp.swapaxes(k, -1, -2)) / math.sqrt(H)
    attn = jax.nn.softmax(scores, axis=-1)
    out = (attn @ v) @ p["wo"]
    if not update_memory:
        return out
    imp = x @ p["wi"].T + p["bi"]                        # bias kept here on purpose
    iw = jax.nn.softmax(imp, axis=1)
    ctx = jnp.sum(x * iw, axis=1, keepdims=True)         # (B, 1, H)
    u = jax.nn.sigmoid(memb @ p["wu_m"] + ctx @ p["wu_c"] + p["bu"])
    r = jax.nn.sigmoid(memb @ p["wr_m"] + ctx @ p["wr_c"] + p["br"])
    n = jnp.tanh((r * memb) @ p["wn_m"] + ctx @ p["wn_c"] + p["bn"])
    upd = (1.0 - u) * memb + u * n
    return out, jnp.mean(upd, axis=0)


# ----------------------------------------------------------------------------
if __name__ == "__main__":
    B, S, H, M = 2, 8, 128, 16   # batch, seq, hidden_size, working_memory_size

    key = jax.random.PRNGKey(0)
    kp, kx = jax.random.split(key)
    params = init_params(kp, hidden_size=H, memory_size=M)
    x = jax.random.normal(kx, (B, S, H), jnp.float32)

    with jax.default_matmul_precision("highest"):
        ref1 = reference_forward(x, params, update_memory=False)
        ref2, ref_mem = reference_forward(x, params, update_memory=True)

    def check(got, want, tol):
        np.testing.assert_allclose(np.asarray(got, np.float32),
                                   np.asarray(want, np.float32),
                                   atol=tol, rtol=tol)

    # --- f32 compute path ---
    out = jax.block_until_ready(
        working_memory_forward(x, params, update_memory=False,
                               compute_dtype=jnp.float32))
    check(out, ref1, 2e-2)

    out_u, new_mem = jax.block_until_ready(
        working_memory_forward(x, params, update_memory=True,
                               compute_dtype=jnp.float32))
    check(out_u, ref2, 2e-2)
    check(new_mem, ref_mem, 2e-2)

    # --- bf16 compute path (default: MXU-rate operands, f32 accumulation) ---
    out_bf = jax.block_until_ready(
        working_memory_forward(x, params, update_memory=False))
    check(out_bf, ref1, 2e-1)

    out_bfu, new_mem_bf = jax.block_until_ready(
        working_memory_forward(x, params, update_memory=True))
    check(out_bfu, ref2, 2e-1)
    check(new_mem_bf, ref_mem, 2e-1)

    print("KERNEL_OK")
</pallas_src>

<mosaic_0001>
module attributes {stable_mosaic.version = 11 : i64} {
  func.func @_attn_rows_kernel(%arg0: i32, %arg1: memref<16x128xf32, #tpu.memory_space<vmem>>, %arg2: memref<128x128xf32, #tpu.memory_space<vmem>>, %arg3: memref<128x128xf32, #tpu.memory_space<vmem>>, %arg4: memref<128x128xf32, #tpu.memory_space<vmem>>, %arg5: memref<128x128xf32, #tpu.memory_space<vmem>>, %arg6: memref<16x128xf32, #tpu.memory_space<vmem>>) attributes {dimension_semantics = [#tpu.dimension_semantics<parallel>], iteration_bounds = array<i64: 1>, scalar_prefetch = 0 : i64, scratch_operands = 0 : i64, tpu.core_type = #tpu.core_type<tc>, window_params = [{transform_indices = @transform_0, window_bounds = array<i64: 16, 128>}, {pipeline_mode = #tpu.pipeline_mode<synchronous>, transform_indices = @transform_1, window_bounds = array<i64: 128, 128>}, {pipeline_mode = #tpu.pipeline_mode<synchronous>, transform_indices = @transform_2, window_bounds = array<i64: 128, 128>}, {pipeline_mode = #tpu.pipeline_mode<synchronous>, transform_indices = @transform_3, window_bounds = array<i64: 128, 128>}, {pipeline_mode = #tpu.pipeline_mode<synchronous>, transform_indices = @transform_4, window_bounds = array<i64: 128, 128>}, {transform_indices = @transform_5, window_bounds = array<i64: 16, 128>}]} {
    %c0 = arith.constant 0 : index
    %c0_0 = arith.constant 0 : index
    %0 = vector.load %arg1[%c0, %c0_0] : memref<16x128xf32, #tpu.memory_space<vmem>>, vector<16x128xf32>
    %c0_1 = arith.constant 0 : index
    %c0_2 = arith.constant 0 : index
    %1 = vector.load %arg4[%c0_1, %c0_2] : memref<128x128xf32, #tpu.memory_space<vmem>>, vector<128x128xf32>
    %cst = arith.constant dense<0.000000e+00> : vector<16x128xf32>
    %2 = tpu.matmul %0, %1, %cst {dimension_numbers = #tpu.dot_dimension_numbers<[1], [0], [0], [1], [0, 0, 1, 1], [], []>} : vector<16x128xf32>, vector<128x128xf32>, vector<16x128xf32> -> vector<16x128xf32>
    %c0_3 = arith.constant 0 : index
    %c0_4 = arith.constant 0 : index
    %3 = vector.load %arg2[%c0_3, %c0_4] : memref<128x128xf32, #tpu.memory_space<vmem>>, vector<128x128xf32>
    %cst_5 = arith.constant dense<0.000000e+00> : vector<16x128xf32>
    %4 = tpu.matmul %2, %3, %cst_5 {dimension_numbers = #tpu.dot_dimension_numbers<[1], [0], [0], [1], [0, 0, 1, 1], [], []>} : vector<16x128xf32>, vector<128x128xf32>, vector<16x128xf32> -> vector<16x128xf32>
    %5 = tpu.iota {dimensions = array<i32: 1>} : vector<16x128xi32>
    %c16_i32 = arith.constant 16 : i32
    %6 = vector.broadcast %c16_i32 : i32 to vector<16x128xi32>
    %7 = arith.cmpi slt, %5, %6 : vector<16x128xi32>
    %cst_6 = arith.constant -1.000000e+30 : f32
    %8 = vector.broadcast %cst_6 : f32 to vector<16x128xf32>
    %9 = arith.select %7, %4, %8 : vector<16x128xi1>, vector<16x128xf32>
    %cst_7 = arith.constant dense<0xFF800000> : vector<16xf32>
    %10 = vector.multi_reduction <maximumf>, %9, %cst_7 [1] : vector<16x128xf32> to vector<16xf32>
    %11 = vector.shape_cast %10 : vector<16xf32> to vector<16x1xf32>
    %12 = vector.broadcast %11 : vector<16x1xf32> to vector<16x128xf32>
    %13 = arith.subf %9, %12 : vector<16x128xf32>
    %14 = math.exp %13 : vector<16x128xf32>
    %cst_8 = arith.constant dense<0.000000e+00> : vector<16xf32>
    %15 = vector.multi_reduction <add>, %14, %cst_8 [1] : vector<16x128xf32> to vector<16xf32>
    %16 = vector.shape_cast %15 : vector<16xf32> to vector<16x1xf32>
    %17 = tpu.reciprocal %16 {approx = true} : vector<16x1xf32> -> vector<16x1xf32>
    %18 = arith.mulf %16, %17 : vector<16x1xf32>
    %cst_9 = arith.constant 2.000000e+00 : f32
    %19 = vector.broadcast %cst_9 : f32 to vector<16x1xf32>
    %20 = arith.subf %19, %18 : vector<16x1xf32>
    %21 = arith.mulf %17, %20 : vector<16x1xf32>
    %22 = vector.broadcast %21 : vector<16x1xf32> to vector<16x128xf32>
    %23 = arith.mulf %14, %22 : vector<16x128xf32>
    %c0_10 = arith.constant 0 : index
    %c0_11 = arith.constant 0 : index
    %24 = vector.load %arg3[%c0_10, %c0_11] : memref<128x128xf32, #tpu.memory_space<vmem>>, vector<128x128xf32>
    %cst_12 = arith.constant dense<0.000000e+00> : vector<16x128xf32>
    %25 = tpu.matmul %23, %24, %cst_12 {dimension_numbers = #tpu.dot_dimension_numbers<[1], [0], [0], [1], [0, 0, 1, 1], [], []>} : vector<16x128xf32>, vector<128x128xf32>, vector<16x128xf32> -> vector<16x128xf32>
    %c0_13 = arith.constant 0 : index
    %c0_14 = arith.constant 0 : index
    %26 = vector.load %arg5[%c0_13, %c0_14] : memref<128x128xf32, #tpu.memory_space<vmem>>, vector<128x128xf32>
    %cst_15 = arith.constant dense<0.000000e+00> : vector<16x128xf32>
    %27 = tpu.matmul %25, %26, %cst_15 {dimension_numbers = #tpu.dot_dimension_numbers<[1], [0], [0], [1], [0, 0, 1, 1], [], []>} : vector<16x128xf32>, vector<128x128xf32>, vector<16x128xf32> -> vector<16x128xf32>
    %c0_16 = arith.constant 0 : index
    %c0_17 = arith.constant 0 : index
    %28 = vector.load %arg6[%c0_16, %c0_17] : memref<16x128xf32, #tpu.memory_space<vmem>>, vector<16x128xf32>
    tpu.vector_store %arg6[%c0_16, %c0_17], %27 {strides = array<i32>} : memref<16x128xf32, #tpu.memory_space<vmem>>, vector<16x128xf32>,
    return
  }
  func.func @transform_0(%arg0: i32) -> (i32, i32) {
    %c0_i32 = arith.constant 0 : i32
    %c0_i32_0 = arith.constant 0 : i32
    return %arg0, %c0_i32 : i32, i32
  }
  func.func @transform_1(%arg0: i32) -> (i32, i32) {
    %c0_i32 = arith.constant 0 : i32
    %c0_i32_0 = arith.constant 0 : i32
    %c0_i32_1 = arith.constant 0 : i32
    return %c0_i32, %c0_i32_0 : i32, i32
  }
  func.func @transform_2(%arg0: i32) -> (i32, i32) {
    %c0_i32 = arith.constant 0 : i32
    %c0_i32_0 = arith.constant 0 : i32
    %c0_i32_1 = arith.constant 0 : i32
    return %c0_i32, %c0_i32_0 : i32, i32
  }
  func.func @transform_3(%arg0: i32) -> (i32, i32) {
    %c0_i32 = arith.constant 0 : i32
    %c0_i32_0 = arith.constant 0 : i32
    %c0_i32_1 = arith.constant 0 : i32
    return %c0_i32, %c0_i32_0 : i32, i32
  }
  func.func @transform_4(%arg0: i32) -> (i32, i32) {
    %c0_i32 = arith.constant 0 : i32
    %c0_i32_0 = arith.constant 0 : i32
    %c0_i32_1 = arith.constant 0 : i32
    return %c0_i32, %c0_i32_0 : i32, i32
  }
  func.func @transform_5(%arg0: i32) -> (i32, i32) {
    %c0_i32 = arith.constant 0 : i32
    %c0_i32_0 = arith.constant 0 : i32
    return %arg0, %c0_i32 : i32, i32
  }
}

</mosaic_0001>

<llo_original>
// kernel: tpu_custom_call.1
$region0: #{tpu_custom_call.1}
  #allocation0 [shape = 'u32[]', space=smem, size = 0x4, offset = 0x4, fixed_abs, tag = 'smem constant byte address 0x4 - core index']
  #allocation1 [shape = 'u32[144,128]{1,0:T(1,128)}', space=vmem, size = 0x12000, scoped, tag = 'internal scratch']
  %s0 = inlined_call_operand.hbm [shape: f32[16,128], index: 0, kind: input, shape index: {}]
  %s1 = inlined_call_operand.hbm [shape: f32[128,128], index: 1, kind: input, shape index: {}]
  %s2 = inlined_call_operand.hbm [shape: f32[128,128], index: 2, kind: input, shape index: {}]
  %s3 = inlined_call_operand.hbm [shape: f32[128,128], index: 3, kind: input, shape index: {}]
  %s4 = inlined_call_operand.hbm [shape: f32[128,128], index: 4, kind: input, shape index: {}]
  %s5 = inlined_call_operand.hbm [shape: f32[16,128], index: 5, kind: output, shape index: {}]
  %s6 = sld [smem:[#allocation0]]
  $region50: #{tpu_custom_call.1} parent=0
    _
  %s8 = ssub.s32 1, %s6
  %s9 = scalar_select 0, %s8, %s6
  $region1: #{tpu_custom_call.1} parent=0
    #allocation2 [shape = 'u8[8192]{0}', space=vmem, size = 0x2000, scoped, tag = 'input window, operand 0, single buffered']
    #allocation3 [shape = 's32[1]{0}', space=sflag, size = 0x4, scoped, tag = 'scoped memory for tpu_custom_call.1']
    #allocation4 [shape = 's32[1]{0}', space=sflag, size = 0x4, scoped, tag = 'scoped memory for tpu_custom_call.1']
    #allocation5 [shape = 'u8[65536]{0}', space=vmem, size = 0x10000, scoped, tag = 'input window, operand 1, single buffered']
    #allocation6 [shape = 's32[1]{0}', space=sflag, size = 0x4, scoped, tag = 'scoped memory for tpu_custom_call.1']
    #allocation7 [shape = 'u8[65536]{0}', space=vmem, size = 0x10000, scoped, tag = 'input window, operand 2, single buffered']
    #allocation8 [shape = 'u8[65536]{0}', space=vmem, size = 0x10000, scoped, tag = 'input window, operand 3, single buffered']
    #allocation9 [shape = 's32[1]{0}', space=sflag, size = 0x4, scoped, tag = 'scoped memory for tpu_custom_call.1']
    #allocation10 [shape = 'u8[65536]{0}', space=vmem, size = 0x10000, scoped, tag = 'input window, operand 4, single buffered']
    #allocation11 [shape = 'u8[8192]{0}', space=vmem, size = 0x2000, scoped, tag = 'output window, operand 0, single buffered']
    %10 = vsyncpa [#allocation3], 0
    %11 = vsyncpa [#allocation6], 0
    %12 = vsyncpa [#allocation9], 0
    %13 = vsyncpa [#allocation4], 0
    // Predicated region
    $region2: #{tpu_custom_call.1} parent=1 // pred_check
      _
    $region3: #{tpu_custom_call.1} parent=1 // pred_check_branch
      %15 = sbr.rel (0) target = $region5
    $region4: #{tpu_custom_call.1} parent=1 // pred_region
      %s17 = ssub.s32 256, 256
      %18 = vsyncadd [#allocation3], %s17
      %s19 = sshll.u32 [#allocation2], 4
      %s20 = int_to_ptr.vmem [resolvable:$true] %s19
      %25 = dma.hbm_to_vmem [thread:$0]  %s0, 256, %s20, [#allocation3], 128, 128, 8
    $region5: #{tpu_custom_call.1} parent=1 // pred_fallthru
      _
    // Predicated region
    $region6: #{tpu_custom_call.1} parent=1 // pred_check
      _
    $region7: #{tpu_custom_call.1} parent=1 // pred_check_branch
      %27 = sbr.rel (0) target = $region9
    $region8: #{tpu_custom_call.1} parent=1 // pred_region
      %s29 = ssub.s32 2048, 2048
      %30 = vsyncadd [#allocation6], %s29
      %s31 = sshll.u32 [#allocation5], 4
      %s32 = int_to_ptr.vmem [resolvable:$true] %s31
      %37 = dma.hbm_to_vmem [thread:$0]  %s1, 2048, %s32, [#allocation6], 128, 128, 8
    $region9: #{tpu_custom_call.1} parent=1 // pred_fallthru
      _
    // Predicated region
    $region10: #{tpu_custom_call.1} parent=1 // pred_check
      _
    $region11: #{tpu_custom_call.1} parent=1 // pred_check_branch
      %39 = sbr.rel (0) target = $region13
    $region12: #{tpu_custom_call.1} parent=1 // pred_region
      %s41 = ssub.s32 2048, 2048
      %42 = vsyncadd [#allocation6], %s41
      %s43 = sshll.u32 [#allocation7], 4
      %s44 = int_to_ptr.vmem [resolvable:$true] %s43
      %49 = dma.hbm_to_vmem [thread:$0]  %s2, 2048, %s44, [#allocation6], 128, 128, 8
    $region13: #{tpu_custom_call.1} parent=1 // pred_fallthru
      _
    // Predicated region
    $region14: #{tpu_custom_call.1} parent=1 // pred_check
      _
    $region15: #{tpu_custom_call.1} parent=1 // pred_check_branch
      %51 = sbr.rel (0) target = $region17
    $region16: #{tpu_custom_call.1} parent=1 // pred_region
      %s53 = ssub.s32 2048, 2048
      %54 = vsyncadd [#allocation9], %s53
      %s55 = sshll.u32 [#allocation8], 4
      %s56 = int_to_ptr.vmem [resolvable:$true] %s55
      %61 = dma.hbm_to_vmem [thread:$0]  %s3, 2048, %s56, [#allocation9], 128, 128, 8
    $region17: #{tpu_custom_call.1} parent=1 // pred_fallthru
      _
    // Predicated region
    $region18: #{tpu_custom_call.1} parent=1 // pred_check
      _
    $region19: #{tpu_custom_call.1} parent=1 // pred_check_branch
      %63 = sbr.rel (0) target = $region21
    $region20: #{tpu_custom_call.1} parent=1 // pred_region
      %s65 = ssub.s32 2048, 2048
      %66 = vsyncadd [#allocation9], %s65
      %s67 = sshll.u32 [#allocation10], 4
      %s68 = int_to_ptr.vmem [resolvable:$true] %s67
      %73 = dma.hbm_to_vmem [thread:$0]  %s4, 2048, %s68, [#allocation9], 128, 128, 8
    $region21: #{tpu_custom_call.1} parent=1 // pred_fallthru
      _
    // Predicated region
    $region22: #{tpu_custom_call.1} parent=1 // pred_check
      _
    $region23: #{tpu_custom_call.1} parent=1 // pred_check_branch
      %75 = sbr.rel (0) target = $region25
    $region24: #{tpu_custom_call.1} parent=1 // pred_region
      %76 = dma.done [#allocation3], 256
    $region25: #{tpu_custom_call.1} parent=1 // pred_fallthru
      _
    // Predicated region
    $region26: #{tpu_custom_call.1} parent=1 // pred_check
      _
    $region27: #{tpu_custom_call.1} parent=1 // pred_check_branch
      %78 = sbr.rel (0) target = $region29
    $region28: #{tpu_custom_call.1} parent=1 // pred_region
      %79 = dma.done [#allocation6], 2048
    $region29: #{tpu_custom_call.1} parent=1 // pred_fallthru
      _
    // Predicated region
    $region30: #{tpu_custom_call.1} parent=1 // pred_check
      _
    $region31: #{tpu_custom_call.1} parent=1 // pred_check_branch
      %81 = sbr.rel (0) target = $region33
    $region32: #{tpu_custom_call.1} parent=1 // pred_region
      %82 = dma.done [#allocation6], 2048
    $region33: #{tpu_custom_call.1} parent=1 // pred_fallthru
      _
    // Predicated region
    $region34: #{tpu_custom_call.1} parent=1 // pred_check
      _
    $region35: #{tpu_custom_call.1} parent=1 // pred_check_branch
      %84 = sbr.rel (0) target = $region37
    $region36: #{tpu_custom_call.1} parent=1 // pred_region
      %85 = dma.done [#allocation9], 2048
    $region37: #{tpu_custom_call.1} parent=1 // pred_fallthru
      _
    // Predicated region
    $region38: #{tpu_custom_call.1} parent=1 // pred_check
      _
    $region39: #{tpu_custom_call.1} parent=1 // pred_check_branch
      %87 = sbr.rel (0) target = $region41
    $region40: #{tpu_custom_call.1} parent=1 // pred_region
      %88 = dma.done [#allocation9], 2048
    $region41: #{tpu_custom_call.1} parent=1 // pred_fallthru
      _
    %v89 = vld [vmem:[#allocation2] sm:$0xff]
    %v90 = vld [vmem:[#allocation2 + $0x8] sm:$0xff]
    %v91 = vld [vmem:[#allocation8] sm:$0xff]
    %v92 = vld [vmem:[#allocation8 + $0x8] sm:$0xff]
    %v93 = vld [vmem:[#allocation8 + $0x10] sm:$0xff]
    %v94 = vld [vmem:[#allocation8 + $0x18] sm:$0xff]
    %v95 = vld [vmem:[#allocation8 + $0x20] sm:$0xff]
    %v96 = vld [vmem:[#allocation8 + $0x28] sm:$0xff]
    %v97 = vld [vmem:[#allocation8 + $0x30] sm:$0xff]
    %v98 = vld [vmem:[#allocation8 + $0x38] sm:$0xff]
    %v99 = vld [vmem:[#allocation8 + $0x40] sm:$0xff]
    %v100 = vld [vmem:[#allocation8 + $0x48] sm:$0xff]
    %v101 = vld [vmem:[#allocation8 + $0x50] sm:$0xff]
    %v102 = vld [vmem:[#allocation8 + $0x58] sm:$0xff]
    %v103 = vld [vmem:[#allocation8 + $0x60] sm:$0xff]
    %v104 = vld [vmem:[#allocation8 + $0x68] sm:$0xff]
    %v105 = vld [vmem:[#allocation8 + $0x70] sm:$0xff]
    %v106 = vld [vmem:[#allocation8 + $0x78] sm:$0xff]
    %107 = vmatprep.subr.mxu0 0.0
    %108 = vmatpush1.msra.mxu0 %v106
    %109 = vmatprep.subr.mxu0 0.0
    %110 = vmatpush1.msra.mxu0 %v105
    %111 = vmatprep.subr.mxu0 0.0
    %112 = vmatpush1.msra.mxu0 %v104
    %113 = vmatprep.subr.mxu0 0.0
    %114 = vmatpush1.msra.mxu0 %v103
    %115 = vmatprep.subr.mxu0 0.0
    %116 = vmatpush1.msra.mxu0 %v102
    %117 = vmatprep.subr.mxu0 0.0
    %118 = vmatpush1.msra.mxu0 %v101
    %119 = vmatprep.subr.mxu0 0.0
    %120 = vmatpush1.msra.mxu0 %v100
    %121 = vmatprep.subr.mxu0 0.0
    %122 = vmatpush1.msra.mxu0 %v99
    %123 = vmatprep.subr.mxu0 0.0
    %124 = vmatpush1.msra.mxu0 %v98
    %125 = vmatprep.subr.mxu0 0.0
    %126 = vmatpush1.msra.mxu0 %v97
    %127 = vmatprep.subr.mxu0 0.0
    %128 = vmatpush1.msra.mxu0 %v96
    %129 = vmatprep.subr.mxu0 0.0
    %130 = vmatpush1.msra.mxu0 %v95
    %131 = vmatprep.subr.mxu0 0.0
    %132 = vmatpush1.msra.mxu0 %v94
    %133 = vmatprep.subr.mxu0 0.0
    %134 = vmatpush1.msra.mxu0 %v93
    %135 = vmatprep.subr.mxu0 0.0
    %136 = vmatpush1.msra.mxu0 %v92
    %137 = vmatprep.subr.mxu0 0.0
    %138 = vmatpush1.msra.mxu0 %v91
    %139 = vmatprep.subr.mxu0 0.0
    %140 = vmatpush2.msra.mxu0 0.0
    %141 = vmatprep.subr.mxu0 0.0
    %142 = vmatpush2.msra.mxu0 0.0
    %143 = vmatprep.subr.mxu0 0.0
    %144 = vmatpush2.msra.mxu0 0.0
    %145 = vmatprep.subr.mxu0 0.0
    %146 = vmatpush2.msra.mxu0 0.0
    %147 = vmatprep.subr.mxu0 0.0
    %148 = vmatpush2.msra.mxu0 0.0
    %149 = vmatprep.subr.mxu0 0.0
    %150 = vmatpush2.msra.mxu0 0.0
    %151 = vmatprep.subr.mxu0 0.0
    %152 = vmatpush2.msra.mxu0 0.0
    %153 = vmatprep.subr.mxu0 0.0
    %154 = vmatpush2.msra.mxu0 0.0
    %155 = vmatprep.subr.mxu0 0.0
    %156 = vmatpush2.msra.mxu0 0.0
    %157 = vmatprep.subr.mxu0 0.0
    %158 = vmatpush2.msra.mxu0 0.0
    %159 = vmatprep.subr.mxu0 0.0
    %160 = vmatpush2.msra.mxu0 0.0
    %161 = vmatprep.subr.mxu0 0.0
    %162 = vmatpush2.msra.mxu0 0.0
    %163 = vmatprep.subr.mxu0 0.0
    %164 = vmatpush2.msra.mxu0 0.0
    %165 = vmatprep.subr.mxu0 0.0
    %166 = vmatpush2.msra.mxu0 0.0
    %167 = vmatprep.subr.mxu0 0.0
    %168 = vmatpush2.msra.mxu0 0.0
    %169 = vmatprep.subr.mxu0 0.0
    %170 = vmatpush2.msra.mxu0 0.0
    %171 = vmatprep.mubr.f32.mxu0 0.0
    %172 = vmatmul.mubr.f32.gmra.mxu0 %v89
    %v173 = vpop.f32.mrf.mxu0
    %v174 = vadd.f32 0.0, %v173
    %v175 = vpop.f32.mrf.mxu0
    %176 = vmatprep.mubr.f32.mxu0 0.0
    %177 = vmatmul.mubr.f32.gmra.mxu0 %v90
    %v178 = vpop.f32.mrf.mxu0
    %v179 = vadd.f32 0.0, %v178
    %v180 = vpop.f32.mrf.mxu0
    %181 = vdwg.mxu0
    %v182 = vld [vmem:[#allocation5] sm:$0xff]
    %v183 = vld [vmem:[#allocation5 + $0x8] sm:$0xff]
    %v184 = vld [vmem:[#allocation5 + $0x10] sm:$0xff]
    %v185 = vld [vmem:[#allocation5 + $0x18] sm:$0xff]
    %v186 = vld [vmem:[#allocation5 + $0x20] sm:$0xff]
    %v187 = vld [vmem:[#allocation5 + $0x28] sm:$0xff]
    %v188 = vld [vmem:[#allocation5 + $0x30] sm:$0xff]
    %v189 = vld [vmem:[#allocation5 + $0x38] sm:$0xff]
    %v190 = vld [vmem:[#allocation5 + $0x40] sm:$0xff]
    %v191 = vld [vmem:[#allocation5 + $0x48] sm:$0xff]
    %v192 = vld [vmem:[#allocation5 + $0x50] sm:$0xff]
    %v193 = vld [vmem:[#allocation5 + $0x58] sm:$0xff]
    %v194 = vld [vmem:[#allocation5 + $0x60] sm:$0xff]
    %v195 = vld [vmem:[#allocation5 + $0x68] sm:$0xff]
    %v196 = vld [vmem:[#allocation5 + $0x70] sm:$0xff]
    %v197 = vld [vmem:[#allocation5 + $0x78] sm:$0xff]
    %198 = vmatprep.subr.mxu0 0.0
    %199 = vmatpush1.msra.mxu0 %v197
    %200 = vmatprep.subr.mxu0 0.0
    %201 = vmatpush1.msra.mxu0 %v196
    %202 = vmatprep.subr.mxu0 0.0
    %203 = vmatpush1.msra.mxu0 %v195
    %204 = vmatprep.subr.mxu0 0.0
    %205 = vmatpush1.msra.mxu0 %v194
    %206 = vmatprep.subr.mxu0 0.0
    %207 = vmatpush1.msra.mxu0 %v193
    %208 = vmatprep.subr.mxu0 0.0
    %209 = vmatpush1.msra.mxu0 %v192
    %210 = vmatprep.subr.mxu0 0.0
    %211 = vmatpush1.msra.mxu0 %v191
    %212 = vmatprep.subr.mxu0 0.0
    %213 = vmatpush1.msra.mxu0 %v190
    %214 = vmatprep.subr.mxu0 0.0
    %215 = vmatpush1.msra.mxu0 %v189
    %216 = vmatprep.subr.mxu0 0.0
    %217 = vmatpush1.msra.mxu0 %v188
    %218 = vmatprep.subr.mxu0 0.0
    %219 = vmatpush1.msra.mxu0 %v187
    %220 = vmatprep.subr.mxu0 0.0
    %221 = vmatpush1.msra.mxu0 %v186
    %222 = vmatprep.subr.mxu0 0.0
    %223 = vmatpush1.msra.mxu0 %v185
    %224 = vmatprep.subr.mxu0 0.0
    %225 = vmatpush1.msra.mxu0 %v184
    %226 = vmatprep.subr.mxu0 0.0
    %227 = vmatpush1.msra.mxu0 %v183
    %228 = vmatprep.subr.mxu0 0.0
    %229 = vmatpush1.msra.mxu0 %v182
    %230 = vmatprep.subr.mxu0 0.0
    %231 = vmatpush2.msra.mxu0 0.0
    %232 = vmatprep.subr.mxu0 0.0
    %233 = vmatpush2.msra.mxu0 0.0
    %234 = vmatprep.subr.mxu0 0.0
    %235 = vmatpush2.msra.mxu0 0.0
    %236 = vmatprep.subr.mxu0 0.0
    %237 = vmatpush2.msra.mxu0 0.0
    %238 = vmatprep.subr.mxu0 0.0
    %239 = vmatpush2.msra.mxu0 0.0
    %240 = vmatprep.subr.mxu0 0.0
    %241 = vmatpush2.msra.mxu0 0.0
    %242 = vmatprep.subr.mxu0 0.0
    %243 = vmatpush2.msra.mxu0 0.0
    %244 = vmatprep.subr.mxu0 0.0
    %245 = vmatpush2.msra.mxu0 0.0
    %246 = vmatprep.subr.mxu0 0.0
    %247 = vmatpush2.msra.mxu0 0.0
    %248 = vmatprep.subr.mxu0 0.0
    %249 = vmatpush2.msra.mxu0 0.0
    %250 = vmatprep.subr.mxu0 0.0
    %251 = vmatpush2.msra.mxu0 0.0
    %252 = vmatprep.subr.mxu0 0.0
    %253 = vmatpush2.msra.mxu0 0.0
    %254 = vmatprep.subr.mxu0 0.0
    %255 = vmatpush2.msra.mxu0 0.0
    %256 = vmatprep.subr.mxu0 0.0
    %257 = vmatpush2.msra.mxu0 0.0
    %258 = vmatprep.subr.mxu0 0.0
    %259 = vmatpush2.msra.mxu0 0.0
    %260 = vmatprep.subr.mxu0 0.0
    %261 = vmatpush2.msra.mxu0 0.0
    %262 = vmatprep.mubr.f32.mxu0 0.0
    %263 = vmatmul.mubr.f32.gmra.mxu0 %v174
    %v264 = vpop.f32.mrf.mxu0
    %v265 = vadd.f32 0.0, %v264
    %v266 = vpop.f32.mrf.mxu0
    %267 = vmatprep.mubr.f32.mxu0 0.0
    %268 = vmatmul.mubr.f32.gmra.mxu0 %v179
    %v269 = vpop.f32.mrf.mxu0
    %v270 = vadd.f32 0.0, %v269
    %v271 = vpop.f32.mrf.mxu0
    %272 = vdwg.mxu0
    %v273 = vlaneseq
    %v274 = vand.u32 %v273, 127
    %vm275 = vcmp.lt.s32.totalorder %v274, 16
    %v276 = vsel %vm275, %v265, -1e+30
    %v277 = vsel %vm275, %v270, -1e+30
    %278 = vmax.xlane.f32.xlu0 %v276
    %v279 = vpop.xlane.xlu0 %278
    %280 = vmax.xlane.f32.xlu0 %v277
    %v281 = vpop.xlane.xlu0 %280
    %v282 = vsub.f32 %v276, %v279
    %v283 = vsub.f32 %v277, %v281
    %v284 = vmul.f32 %v282, 1.442695
    %v285 = vpow.pop %v284
    %v286 = vmul.f32 %v283, 1.442695
    %v287 = vpow.pop %v286
    %288 = vadd.xlane.f32.xlu0 %v285
    %v289 = vpop.xlane.xlu0 %288
    %290 = vadd.xlane.f32.xlu0 %v287
    %v291 = vpop.xlane.xlu0 %290
    %v292 = vrcp.pop %v289
    %v293 = vrcp.pop %v291
    %v294 = vmul.f32 %v289, %v292
    %v295 = vmul.f32 %v291, %v293
    %v296 = vsub.f32 2.0, %v294
    %v297 = vsub.f32 2.0, %v295
    %v298 = vmul.f32 %v292, %v296
    %v299 = vmul.f32 %v293, %v297
    %v300 = vmul.f32 %v285, %v298
    %v301 = vmul.f32 %v287, %v299
    %v302 = vld [vmem:[#allocation7] sm:$0xff]
    %v303 = vld [vmem:[#allocation7 + $0x8] sm:$0xff]
    %v304 = vld [vmem:[#allocation7 + $0x10] sm:$0xff]
    %v305 = vld [vmem:[#allocation7 + $0x18] sm:$0xff]
    %v306 = vld [vmem:[#allocation7 + $0x20] sm:$0xff]
    %v307 = vld [vmem:[#allocation7 + $0x28] sm:$0xff]
    %v308 = vld [vmem:[#allocation7 + $0x30] sm:$0xff]
    %v309 = vld [vmem:[#allocation7 + $0x38] sm:$0xff]
    %v310 = vld [vmem:[#allocation7 + $0x40] sm:$0xff]
    %v311 = vld [vmem:[#allocation7 + $0x48] sm:$0xff]
    %v312 = vld [vmem:[#allocation7 + $0x50] sm:$0xff]
    %v313 = vld [vmem:[#allocation7 + $0x58] sm:$0xff]
    %v314 = vld [vmem:[#allocation7 + $0x60] sm:$0xff]
    %v315 = vld [vmem:[#allocation7 + $0x68] sm:$0xff]
    %v316 = vld [vmem:[#allocation7 + $0x70] sm:$0xff]
    %v317 = vld [vmem:[#allocation7 + $0x78] sm:$0xff]
    %318 = vmatprep.subr.mxu0 0.0
    %319 = vmatpush1.msra.mxu0 %v317
    %320 = vmatprep.subr.mxu0 0.0
    %321 = vmatpush1.msra.mxu0 %v316
    %322 = vmatprep.subr.mxu0 0.0
    %323 = vmatpush1.msra.mxu0 %v315
    %324 = vmatprep.subr.mxu0 0.0
    %325 = vmatpush1.msra.mxu0 %v314
    %326 = vmatprep.subr.mxu0 0.0
    %327 = vmatpush1.msra.mxu0 %v313
    %328 = vmatprep.subr.mxu0 0.0
    %329 = vmatpush1.msra.mxu0 %v312
    %330 = vmatprep.subr.mxu0 0.0
    %331 = vmatpush1.msra.mxu0 %v311
    %332 = vmatprep.subr.mxu0 0.0
    %333 = vmatpush1.msra.mxu0 %v310
    %334 = vmatprep.subr.mxu0 0.0
    %335 = vmatpush1.msra.mxu0 %v309
    %336 = vmatprep.subr.mxu0 0.0
    %337 = vmatpush1.msra.mxu0 %v308
    %338 = vmatprep.subr.mxu0 0.0
    %339 = vmatpush1.msra.mxu0 %v307
    %340 = vmatprep.subr.mxu0 0.0
    %341 = vmatpush1.msra.mxu0 %v306
    %342 = vmatprep.subr.mxu0 0.0
    %343 = vmatpush1.msra.mxu0 %v305
    %344 = vmatprep.subr.mxu0 0.0
    %345 = vmatpush1.msra.mxu0 %v304
    %346 = vmatprep.subr.mxu0 0.0
    %347 = vmatpush1.msra.mxu0 %v303
    %348 = vmatprep.subr.mxu0 0.0
    %349 = vmatpush1.msra.mxu0 %v302
    %350 = vmatprep.subr.mxu0 0.0
    %351 = vmatpush2.msra.mxu0 0.0
    %352 = vmatprep.subr.mxu0 0.0
    %353 = vmatpush2.msra.mxu0 0.0
    %354 = vmatprep.subr.mxu0 0.0
    %355 = vmatpush2.msra.mxu0 0.0
    %356 = vmatprep.subr.mxu0 0.0
    %357 = vmatpush2.msra.mxu0 0.0
    %358 = vmatprep.subr.mxu0 0.0
    %359 = vmatpush2.msra.mxu0 0.0
    %360 = vmatprep.subr.mxu0 0.0
    %361 = vmatpush2.msra.mxu0 0.0
    %362 = vmatprep.subr.mxu0 0.0
    %363 = vmatpush2.msra.mxu0 0.0
    %364 = vmatprep.subr.mxu0 0.0
    %365 = vmatpush2.msra.mxu0 0.0
    %366 = vmatprep.subr.mxu0 0.0
    %367 = vmatpush2.msra.mxu0 0.0
    %368 = vmatprep.subr.mxu0 0.0
    %369 = vmatpush2.msra.mxu0 0.0
    %370 = vmatprep.subr.mxu0 0.0
    %371 = vmatpush2.msra.mxu0 0.0
    %372 = vmatprep.subr.mxu0 0.0
    %373 = vmatpush2.msra.mxu0 0.0
    %374 = vmatprep.subr.mxu0 0.0
    %375 = vmatpush2.msra.mxu0 0.0
    %376 = vmatprep.subr.mxu0 0.0
    %377 = vmatpush2.msra.mxu0 0.0
    %378 = vmatprep.subr.mxu0 0.0
    %379 = vmatpush2.msra.mxu0 0.0
    %380 = vmatprep.subr.mxu0 0.0
    %381 = vmatpush2.msra.mxu0 0.0
    %382 = vmatprep.mubr.f32.mxu0 0.0
    %383 = vmatmul.mubr.f32.gmra.mxu0 %v300
    %v384 = vpop.f32.mrf.mxu0
    %v385 = vadd.f32 0.0, %v384
    %v386 = vpop.f32.mrf.mxu0
    %387 = vmatprep.mubr.f32.mxu0 0.0
    %388 = vmatmul.mubr.f32.gmra.mxu0 %v301
    %v389 = vpop.f32.mrf.mxu0
    %v390 = vadd.f32 0.0, %v389
    %v391 = vpop.f32.mrf.mxu0
    %392 = vdwg.mxu0
    %v393 = vld [vmem:[#allocation10] sm:$0xff]
    %v394 = vld [vmem:[#allocation10 + $0x8] sm:$0xff]
    %v395 = vld [vmem:[#allocation10 + $0x10] sm:$0xff]
    %v396 = vld [vmem:[#allocation10 + $0x18] sm:$0xff]
    %v397 = vld [vmem:[#allocation10 + $0x20] sm:$0xff]
    %v398 = vld [vmem:[#allocation10 + $0x28] sm:$0xff]
    %v399 = vld [vmem:[#allocation10 + $0x30] sm:$0xff]
    %v400 = vld [vmem:[#allocation10 + $0x38] sm:$0xff]
    %v401 = vld [vmem:[#allocation10 + $0x40] sm:$0xff]
    %v402 = vld [vmem:[#allocation10 + $0x48] sm:$0xff]
    %v403 = vld [vmem:[#allocation10 + $0x50] sm:$0xff]
    %v404 = vld [vmem:[#allocation10 + $0x58] sm:$0xff]
    %v405 = vld [vmem:[#allocation10 + $0x60] sm:$0xff]
    %v406 = vld [vmem:[#allocation10 + $0x68] sm:$0xff]
    %v407 = vld [vmem:[#allocation10 + $0x70] sm:$0xff]
    %v408 = vld [vmem:[#allocation10 + $0x78] sm:$0xff]
    %409 = vmatprep.subr.mxu0 0.0
    %410 = vmatpush1.msra.mxu0 %v408
    %411 = vmatprep.subr.mxu0 0.0
    %412 = vmatpush1.msra.mxu0 %v407
    %413 = vmatprep.subr.mxu0 0.0
    %414 = vmatpush1.msra.mxu0 %v406
    %415 = vmatprep.subr.mxu0 0.0
    %416 = vmatpush1.msra.mxu0 %v405
    %417 = vmatprep.subr.mxu0 0.0
    %418 = vmatpush1.msra.mxu0 %v404
    %419 = vmatprep.subr.mxu0 0.0
    %420 = vmatpush1.msra.mxu0 %v403
    %421 = vmatprep.subr.mxu0 0.0
    %422 = vmatpush1.msra.mxu0 %v402
    %423 = vmatprep.subr.mxu0 0.0
    %424 = vmatpush1.msra.mxu0 %v401
    %425 = vmatprep.subr.mxu0 0.0
    %426 = vmatpush1.msra.mxu0 %v400
    %427 = vmatprep.subr.mxu0 0.0
    %428 = vmatpush1.msra.mxu0 %v399
    %429 = vmatprep.subr.mxu0 0.0
    %430 = vmatpush1.msra.mxu0 %v398
    %431 = vmatprep.subr.mxu0 0.0
    %432 = vmatpush1.msra.mxu0 %v397
    %433 = vmatprep.subr.mxu0 0.0
    %434 = vmatpush1.msra.mxu0 %v396
    %435 = vmatprep.subr.mxu0 0.0
    %436 = vmatpush1.msra.mxu0 %v395
    %437 = vmatprep.subr.mxu0 0.0
    %438 = vmatpush1.msra.mxu0 %v394
    %439 = vmatprep.subr.mxu0 0.0
    %440 = vmatpush1.msra.mxu0 %v393
    %441 = vmatprep.subr.mxu0 0.0
    %442 = vmatpush2.msra.mxu0 0.0
    %443 = vmatprep.subr.mxu0 0.0
    %444 = vmatpush2.msra.mxu0 0.0
    %445 = vmatprep.subr.mxu0 0.0
    %446 = vmatpush2.msra.mxu0 0.0
    %447 = vmatprep.subr.mxu0 0.0
    %448 = vmatpush2.msra.mxu0 0.0
    %449 = vmatprep.subr.mxu0 0.0
    %450 = vmatpush2.msra.mxu0 0.0
    %451 = vmatprep.subr.mxu0 0.0
    %452 = vmatpush2.msra.mxu0 0.0
    %453 = vmatprep.subr.mxu0 0.0
    %454 = vmatpush2.msra.mxu0 0.0
    %455 = vmatprep.subr.mxu0 0.0
    %456 = vmatpush2.msra.mxu0 0.0
    %457 = vmatprep.subr.mxu0 0.0
    %458 = vmatpush2.msra.mxu0 0.0
    %459 = vmatprep.subr.mxu0 0.0
    %460 = vmatpush2.msra.mxu0 0.0
    %461 = vmatprep.subr.mxu0 0.0
    %462 = vmatpush2.msra.mxu0 0.0
    %463 = vmatprep.subr.mxu0 0.0
    %464 = vmatpush2.msra.mxu0 0.0
    %465 = vmatprep.subr.mxu0 0.0
    %466 = vmatpush2.msra.mxu0 0.0
    %467 = vmatprep.subr.mxu0 0.0
    %468 = vmatpush2.msra.mxu0 0.0
    %469 = vmatprep.subr.mxu0 0.0
    %470 = vmatpush2.msra.mxu0 0.0
    %471 = vmatprep.subr.mxu0 0.0
    %472 = vmatpush2.msra.mxu0 0.0
    %473 = vmatprep.mubr.f32.mxu0 0.0
    %474 = vmatmul.mubr.f32.gmra.mxu0 %v385
    %v475 = vpop.f32.mrf.mxu0
    %v476 = vadd.f32 0.0, %v475
    %v477 = vpop.f32.mrf.mxu0
    %478 = vmatprep.mubr.f32.mxu0 0.0
    %479 = vmatmul.mubr.f32.gmra.mxu0 %v390
    %v480 = vpop.f32.mrf.mxu0
    %v481 = vadd.f32 0.0, %v480
    %v482 = vpop.f32.mrf.mxu0
    %483 = vdwg.mxu0
    %484 = vst [vmem:[#allocation11] sm:$0xff] %v476
    %485 = vst [vmem:[#allocation11 + $0x8] sm:$0xff] %v481
    // Predicated region
    $region42: #{tpu_custom_call.1} parent=1 // pred_check
      _
    $region43: #{tpu_custom_call.1} parent=1 // pred_check_branch
      %487 = sbr.rel (0) target = $region45
    $region44: #{tpu_custom_call.1} parent=1 // pred_region
      %s489 = ssub.s32 256, 256
      %490 = vsyncadd [#allocation4], %s489
      %s491 = sshll.u32 [#allocation11], 4
      %s492 = int_to_ptr.vmem [resolvable:$true] %s491
      %497 = dma.vmem_to_hbm [thread:$0]  %s492, 256, %s5, [#allocation4], 128, 128, 8
    $region45: #{tpu_custom_call.1} parent=1 // pred_fallthru
      _
    // Predicated region
    $region46: #{tpu_custom_call.1} parent=1 // pred_check
      _
    $region47: #{tpu_custom_call.1} parent=1 // pred_check_branch
      %499 = sbr.rel (0) target = $region49
    $region48: #{tpu_custom_call.1} parent=1 // pred_region
      %500 = dma.done [#allocation4], 256
    $region49: #{tpu_custom_call.1} parent=1 // pred_fallthru
      _
    %501 = vsyncpa [#allocation3], 1
    %502 = vsyncpa [#allocation6], 1
    %503 = vsyncpa [#allocation9], 1
    %504 = vsyncpa [#allocation4], 1

</llo_original>
